<compile_context>
chip_gen: v7x
topology: tpu7x:2x2x1
jax: 0.10.0
libtpu: 0.0.40
codegen_flags: <defaults>
</compile_context>

<pallas_src>
import jax
import jax.numpy as jnp
import numpy as np
from jax.experimental import pallas as pl
from jax.experimental.pallas import tpu as pltpu


def attention_kernel(p_ref, h_ref, wa_ref, w1b_ref, w2b_ref, out_ref):
    """Single VMEM-resident block; scores, softmax and context fully fused.

    p_ref  : (B, S, R)  pointer_input
    h_ref  : (B, R)     h_t squeezed
    wa_ref : (R, 2)     [pt_1.weight[:, :R].T | pt_2.weight[:, :R].T]
    w1b_ref: (R, 1)     pt_1.weight[:, R:].T   (applied to h_t)
    w2b_ref: (R, 1)     pt_2.weight[:, R:].T   (applied to c_t)
    out_ref: (B, S)     pi_t (leading size-1 axis added by the wrapper)
    """
    B, S, R = p_ref.shape
    P = p_ref[...]                                            # (B, S, R)

    # --- both pointer projections of P with ONE MXU matmul -------------------
    sP = jnp.dot(P.reshape(B * S, R), wa_ref[...],
                 preferred_element_type=jnp.float32)          # (B*S, 2)
    sP = sP.reshape(B, S, 2)
    s1 = sP[..., 0]                                           # (B, S)  pt_1 P-term
    s2 = sP[..., 1]                                           # (B, S)  pt_2 P-term

    # --- pt_1 h_t-term (constant along S): tiny MXU matvec -------------------
    hb = jnp.dot(h_ref[...], w1b_ref[...],
                 preferred_element_type=jnp.float32)          # (B, 1)
    s1 = s1 + hb

    # --- softmax over the sequence axis (torch dim=1), f32 -------------------
    m = jnp.max(s1, axis=1, keepdims=True)
    e = jnp.exp(s1 - m)
    a_t = e / jnp.sum(e, axis=1, keepdims=True)               # (B, S)

    # --- context vector c_t = bmm(P^T, a_t): batched MXU dot -----------------
    c_t = jnp.einsum('bqs,bsr->bqr', a_t[:, None, :], P,
                     preferred_element_type=jnp.float32)      # (B, 1, R)
    c_t = c_t[:, 0, :]                                        # (B, R)

    # --- pt_2 c_t-term and final raw scores ----------------------------------
    cb = jnp.dot(c_t, w2b_ref[...],
                 preferred_element_type=jnp.float32)          # (B, 1)
    out_ref[...] = (s2 + cb).astype(out_ref.dtype)


@jax.jit
def attention_forward(pointer_input, h_t, w1, w2):
    """pointer_input: (B, S, R), h_t: (1, B, R), w1/w2: (1, 2R) -> (1, B, S)."""
    B, S, R = pointer_input.shape
    dtype = pointer_input.dtype
    h = h_t[0]                                                # (B, R)

    # One-time host-side weight prep (zero-cost reshapes, done outside kernel).
    w1f = w1.reshape(2 * R)
    w2f = w2.reshape(2 * R)
    wa = jnp.stack([w1f[:R], w2f[:R]], axis=1)                # (R, 2) -> applied to P
    w1b = w1f[R:].reshape(R, 1)                               # (R, 1) -> applied to h_t
    w2b = w2f[R:].reshape(R, 1)                               # (R, 1) -> applied to c_t

    cost = pl.CostEstimate(
        flops=6 * B * S * R + 4 * B * R,
        transcendentals=B * S,
        bytes_accessed=4 * (B * S * R + B * R + 4 * R + B * S),
    )

    out = pl.pallas_call(
        attention_kernel,
        out_shape=jax.ShapeDtypeStruct((B, S), dtype),
        in_specs=[pl.BlockSpec(memory_space=pltpu.MemorySpace.VMEM)] * 5,
        out_specs=pl.BlockSpec(memory_space=pltpu.MemorySpace.VMEM),
        cost_estimate=cost,
    )(pointer_input, h, wa, w1b, w2b)
    return out[None, :, :]                                    # (1, B, S)


def attention_reference(pointer_input, h_t, w1, w2):
    """Pure-JAX replica of the PyTorch forward (for correctness checking)."""
    P = jnp.transpose(pointer_input, (0, 2, 1))               # (B, R, S)
    H = jnp.transpose(h_t, (1, 2, 0))                         # (B, R, 1)
    H = jnp.broadcast_to(H, P.shape)                          # (B, R, S)
    cat1 = jnp.concatenate([P, H], axis=1)                    # (B, 2R, S)
    cat1 = jnp.transpose(cat1, (0, 2, 1))                     # (B, S, 2R)
    s1 = jnp.squeeze(cat1 @ w1.T, -1)                         # (B, S)
    a_t = jax.nn.softmax(s1, axis=1)
    c_t = jnp.matmul(P, a_t[:, :, None])                      # (B, R, 1)
    C = jnp.broadcast_to(c_t, P.shape)                        # (B, R, S)
    cat2 = jnp.concatenate([P, C], axis=1)
    cat2 = jnp.transpose(cat2, (0, 2, 1))                     # (B, S, 2R)
    pi_t = jnp.squeeze(cat2 @ w2.T, -1)                       # (B, S)
    return pi_t[None]                                         # (1, B, S)


if __name__ == "__main__":
    # problem_size (seq) = 8, rnn_size = 32, batch = 2
    B, S, R = 2, 8, 32

    key = jax.random.PRNGKey(0)
    k1, k2, k3, k4 = jax.random.split(key, 4)
    pointer_input = jax.random.normal(k1, (B, S, R), dtype=jnp.float32)
    h_t = jax.random.normal(k2, (1, B, R), dtype=jnp.float32)

    # Deterministic init mimicking nn.Linear default: U(-1/sqrt(fan_in), +)
    bound = 1.0 / float(np.sqrt(2 * R))
    w1 = jax.random.uniform(k3, (1, 2 * R), minval=-bound, maxval=bound,
                            dtype=jnp.float32)
    w2 = jax.random.uniform(k4, (1, 2 * R), minval=-bound, maxval=bound,
                            dtype=jnp.float32)

    out = attention_forward(pointer_input, h_t, w1, w2)
    out = jax.block_until_ready(out)

    ref = attention_reference(pointer_input, h_t, w1, w2)
    assert out.shape == (1, B, S), out.shape
    np.testing.assert_allclose(np.asarray(out), np.asarray(ref),
                               rtol=1e-5, atol=1e-5)
    print("KERNEL_OK")
</pallas_src>

<mosaic_0001>
module attributes {stable_mosaic.version = 11 : i64} {
  func.func @attention_kernel(%arg0: memref<2x8x32xf32, #tpu.memory_space<vmem>>, %arg1: memref<2x32xf32, #tpu.memory_space<vmem>>, %arg2: memref<32x2xf32, #tpu.memory_space<vmem>>, %arg3: memref<32x1xf32, #tpu.memory_space<vmem>>, %arg4: memref<32x1xf32, #tpu.memory_space<vmem>>, %arg5: memref<2x8xf32, #tpu.memory_space<vmem>>) attributes {dimension_semantics = [], scalar_prefetch = 0 : i64, scratch_operands = 0 : i64, tpu.core_type = #tpu.core_type<tc>} {
    %c0 = arith.constant 0 : index
    %c0_0 = arith.constant 0 : index
    %c0_1 = arith.constant 0 : index
    %0 = vector.load %arg0[%c0, %c0_0, %c0_1] : memref<2x8x32xf32, #tpu.memory_space<vmem>>, vector<2x8x32xf32>
    %1 = vector.shape_cast %0 : vector<2x8x32xf32> to vector<16x32xf32>
    %c0_2 = arith.constant 0 : index
    %c0_3 = arith.constant 0 : index
    %2 = vector.load %arg2[%c0_2, %c0_3] : memref<32x2xf32, #tpu.memory_space<vmem>>, vector<32x2xf32>
    %cst = arith.constant dense<0.000000e+00> : vector<16x2xf32>
    %3 = tpu.matmul %1, %2, %cst {dimension_numbers = #tpu.dot_dimension_numbers<[1], [0], [0], [1], [0, 0, 1, 1], [], []>} : vector<16x32xf32>, vector<32x2xf32>, vector<16x2xf32> -> vector<16x2xf32>
    %4 = vector.shape_cast %3 : vector<16x2xf32> to vector<2x8x2xf32>
    %5 = vector.extract_strided_slice %4 {offsets = [0, 0, 0], sizes = [2, 8, 1], strides = [1, 1, 1]} : vector<2x8x2xf32> to vector<2x8x1xf32>
    %6 = vector.shape_cast %5 : vector<2x8x1xf32> to vector<2x8xf32>
    %7 = vector.extract_strided_slice %4 {offsets = [0, 0, 1], sizes = [2, 8, 1], strides = [1, 1, 1]} : vector<2x8x2xf32> to vector<2x8x1xf32>
    %8 = vector.shape_cast %7 : vector<2x8x1xf32> to vector<2x8xf32>
    %c0_4 = arith.constant 0 : index
    %c0_5 = arith.constant 0 : index
    %9 = vector.load %arg1[%c0_4, %c0_5] : memref<2x32xf32, #tpu.memory_space<vmem>>, vector<2x32xf32>
    %c0_6 = arith.constant 0 : index
    %c0_7 = arith.constant 0 : index
    %10 = vector.load %arg3[%c0_6, %c0_7] : memref<32x1xf32, #tpu.memory_space<vmem>>, vector<32x1xf32>
    %cst_8 = arith.constant dense<0.000000e+00> : vector<2x1xf32>
    %11 = tpu.matmul %9, %10, %cst_8 {dimension_numbers = #tpu.dot_dimension_numbers<[1], [0], [0], [1], [0, 0, 1, 1], [], []>} : vector<2x32xf32>, vector<32x1xf32>, vector<2x1xf32> -> vector<2x1xf32>
    %12 = vector.broadcast %11 : vector<2x1xf32> to vector<2x8xf32>
    %13 = arith.addf %6, %12 : vector<2x8xf32>
    %cst_9 = arith.constant dense<0xFF800000> : vector<2xf32>
    %14 = vector.multi_reduction <maximumf>, %13, %cst_9 [1] : vector<2x8xf32> to vector<2xf32>
    %15 = vector.shape_cast %14 : vector<2xf32> to vector<2x1xf32>
    %16 = vector.broadcast %15 : vector<2x1xf32> to vector<2x8xf32>
    %17 = arith.subf %13, %16 : vector<2x8xf32>
    %18 = math.exp %17 : vector<2x8xf32>
    %cst_10 = arith.constant dense<0.000000e+00> : vector<2xf32>
    %19 = vector.multi_reduction <add>, %18, %cst_10 [1] : vector<2x8xf32> to vector<2xf32>
    %20 = vector.shape_cast %19 : vector<2xf32> to vector<2x1xf32>
    %21 = vector.broadcast %20 : vector<2x1xf32> to vector<2x8xf32>
    %22 = arith.divf %18, %21 : vector<2x8xf32>
    %23 = vector.shape_cast %22 : vector<2x8xf32> to vector<2x1x8xf32>
    "tpu.trace_start"() <{level = 10 : i32, message = "bqs,bsr->bqr"}> : () -> ()
    %cst_11 = arith.constant dense<0.000000e+00> : vector<2x1x32xf32>
    %24 = tpu.matmul %23, %0, %cst_11 {dimension_numbers = #tpu.dot_dimension_numbers<[2], [1], [1], [2], [0, 0, 0, 1, 1, 2], [0], [0]>} : vector<2x1x8xf32>, vector<2x8x32xf32>, vector<2x1x32xf32> -> vector<2x1x32xf32>
    "tpu.trace_stop"() : () -> ()
    %25 = vector.shape_cast %24 : vector<2x1x32xf32> to vector<2x32xf32>
    %c0_12 = arith.constant 0 : index
    %c0_13 = arith.constant 0 : index
    %26 = vector.load %arg4[%c0_12, %c0_13] : memref<32x1xf32, #tpu.memory_space<vmem>>, vector<32x1xf32>
    %cst_14 = arith.constant dense<0.000000e+00> : vector<2x1xf32>
    %27 = tpu.matmul %25, %26, %cst_14 {dimension_numbers = #tpu.dot_dimension_numbers<[1], [0], [0], [1], [0, 0, 1, 1], [], []>} : vector<2x32xf32>, vector<32x1xf32>, vector<2x1xf32> -> vector<2x1xf32>
    %28 = vector.broadcast %27 : vector<2x1xf32> to vector<2x8xf32>
    %29 = arith.addf %8, %28 : vector<2x8xf32>
    %c0_15 = arith.constant 0 : index
    %c0_16 = arith.constant 0 : index
    %30 = vector.load %arg5[%c0_15, %c0_16] : memref<2x8xf32, #tpu.memory_space<vmem>>, vector<2x8xf32>
    tpu.vector_store %arg5[%c0_15, %c0_16], %29 {strides = array<i32>} : memref<2x8xf32, #tpu.memory_space<vmem>>, vector<2x8xf32>,
    return
  }
}

</mosaic_0001>

<llo_original>
// kernel: attention_forward.1
$region0: #{attention_forward.1}
  #allocation0 [shape = 'u32[]', space=smem, size = 0x4, offset = 0x4, fixed_abs, tag = 'smem constant byte address 0x4 - core index']
  #allocation1 [shape = 'u32[144,128]{1,0:T(1,128)}', space=vmem, size = 0x12000, scoped, tag = 'internal scratch']
  %s0 = inlined_call_operand.vmem [shape: f32[2,8,32], index: 0, kind: input, shape index: {}]
  %s1 = inlined_call_operand.vmem [shape: f32[2,32], index: 1, kind: input, shape index: {}]
  %s2 = inlined_call_operand.vmem [shape: f32[32,2], index: 2, kind: input, shape index: {}]
  %s3 = inlined_call_operand.vmem [shape: f32[32,1], index: 3, kind: input, shape index: {}]
  %s4 = inlined_call_operand.vmem [shape: f32[32,1], index: 4, kind: input, shape index: {}]
  %s5 = inlined_call_operand.hbm [shape: f32[2,8], index: 5, kind: output, shape index: {}]
  %s6 = sld [smem:[#allocation0]]
  $region30: #{attention_forward.1} parent=0
    _
  %s8 = ssub.s32 1, %s6
  %s9 = scalar_select 0, %s8, %s6
  $region1: #{attention_forward.1} parent=0
    #allocation2 [shape = 'u8[1024]{0}', space=vmem, size = 0x400, scoped, tag = 'output window, operand 0, single buffered']
    #allocation3 [shape = 's32[1]{0}', space=sflag, size = 0x4, scoped, tag = 'scoped memory for attention_forward.1']
    %10 = vsyncpa [#allocation3], 0
    // Predicated region
    $region2: #{attention_forward.1} parent=1 // pred_check
      _
    $region3: #{attention_forward.1} parent=1 // pred_check_branch
      %12 = sbr.rel (0) target = $region5
    $region4: #{attention_forward.1} parent=1 // pred_region
      _
    $region5: #{attention_forward.1} parent=1 // pred_fallthru
      _
    // Predicated region
    $region6: #{attention_forward.1} parent=1 // pred_check
      _
    $region7: #{attention_forward.1} parent=1 // pred_check_branch
      %14 = sbr.rel (0) target = $region9
    $region8: #{attention_forward.1} parent=1 // pred_region
      _
    $region9: #{attention_forward.1} parent=1 // pred_fallthru
      _
    // Predicated region
    $region10: #{attention_forward.1} parent=1 // pred_check
      _
    $region11: #{attention_forward.1} parent=1 // pred_check_branch
      %16 = sbr.rel (0) target = $region13
    $region12: #{attention_forward.1} parent=1 // pred_region
      _
    $region13: #{attention_forward.1} parent=1 // pred_fallthru
      _
    // Predicated region
    $region14: #{attention_forward.1} parent=1 // pred_check
      _
    $region15: #{attention_forward.1} parent=1 // pred_check_branch
      %18 = sbr.rel (0) target = $region17
    $region16: #{attention_forward.1} parent=1 // pred_region
      _
    $region17: #{attention_forward.1} parent=1 // pred_fallthru
      _
    // Predicated region
    $region18: #{attention_forward.1} parent=1 // pred_check
      _
    $region19: #{attention_forward.1} parent=1 // pred_check_branch
      %20 = sbr.rel (0) target = $region21
    $region20: #{attention_forward.1} parent=1 // pred_region
      _
    $region21: #{attention_forward.1} parent=1 // pred_fallthru
      _
    %v21 = vld [vmem:[%s0] sm:$0xff]
    %v22 = vld [vmem:[%s0 + $0x8] sm:$0xff]
    %v23 = vld [vmem:[%s2] sm:$0xff]
    %v24 = vld [vmem:[%s2 + $0x8] sm:$0xff]
    %v25 = vld [vmem:[%s2 + $0x10] sm:$0xff]
    %v26 = vld [vmem:[%s2 + $0x18] sm:$0xff]
    %vm27 = vcmask 261120
    %v29 = vsel %vm27, %v21, 0
    %v32 = vsel %vm27, %v22, 0
    %34 = vmatprep.subr.mxu0 0.0
    %35 = vmatpush1.msra.mxu0 %v23
    %36 = vmatprep.subr.mxu0 0.0
    %37 = vmatpush1.msra.mxu0 %v24
    %38 = vmatprep.subr.mxu0 0.0
    %39 = vmatpush1.msra.mxu0 %v25
    %40 = vmatprep.subr.mxu0 0.0
    %41 = vmatpush1.msra.mxu0 %v26
    %42 = vmatprep.subr.mxu0 0.0
    %43 = vmatpush1.msra.mxu0 0.0
    %44 = vmatprep.subr.mxu0 0.0
    %45 = vmatpush1.msra.mxu0 0.0
    %46 = vmatprep.subr.mxu0 0.0
    %47 = vmatpush1.msra.mxu0 0.0
    %48 = vmatprep.subr.mxu0 0.0
    %49 = vmatpush1.msra.mxu0 0.0
    %50 = vmatprep.subr.mxu0 0.0
    %51 = vmatpush1.msra.mxu0 0.0
    %52 = vmatprep.subr.mxu0 0.0
    %53 = vmatpush1.msra.mxu0 0.0
    %54 = vmatprep.subr.mxu0 0.0
    %55 = vmatpush1.msra.mxu0 0.0
    %56 = vmatprep.subr.mxu0 0.0
    %57 = vmatpush1.msra.mxu0 0.0
    %58 = vmatprep.subr.mxu0 0.0
    %59 = vmatpush1.msra.mxu0 0.0
    %60 = vmatprep.subr.mxu0 0.0
    %61 = vmatpush1.msra.mxu0 0.0
    %62 = vmatprep.subr.mxu0 0.0
    %63 = vmatpush1.msra.mxu0 0.0
    %64 = vmatprep.subr.mxu0 0.0
    %65 = vmatpush1.msra.mxu0 0.0
    %66 = vmatprep.subr.mxu0 0.0
    %67 = vmatpush1.msra.mxu0 0.0
    %68 = vmatprep.subr.mxu0 0.0
    %69 = vmatpush1.msra.mxu0 0.0
    %70 = vmatprep.subr.mxu0 0.0
    %71 = vmatpush1.msra.mxu0 0.0
    %72 = vmatprep.subr.mxu0 0.0
    %73 = vmatpush1.msra.mxu0 0.0
    %74 = vmatprep.subr.mxu0 0.0
    %75 = vmatpush1.msra.mxu0 0.0
    %76 = vmatprep.subr.mxu0 0.0
    %77 = vmatpush1.msra.mxu0 0.0
    %78 = vmatprep.subr.mxu0 0.0
    %79 = vmatpush1.msra.mxu0 0.0
    %80 = vmatprep.subr.mxu0 0.0
    %81 = vmatpush1.msra.mxu0 0.0
    %82 = vmatprep.subr.mxu0 0.0
    %83 = vmatpush1.msra.mxu0 0.0
    %84 = vmatprep.subr.mxu0 0.0
    %85 = vmatpush1.msra.mxu0 0.0
    %86 = vmatprep.subr.mxu0 0.0
    %87 = vmatpush1.msra.mxu0 0.0
    %88 = vmatprep.subr.mxu0 0.0
    %89 = vmatpush1.msra.mxu0 0.0
    %90 = vmatprep.subr.mxu0 0.0
    %91 = vmatpush1.msra.mxu0 0.0
    %92 = vmatprep.subr.mxu0 0.0
    %93 = vmatpush1.msra.mxu0 0.0
    %94 = vmatprep.subr.mxu0 0.0
    %95 = vmatpush1.msra.mxu0 0.0
    %96 = vmatprep.subr.mxu0 0.0
    %97 = vmatpush1.msra.mxu0 0.0
    %98 = vmatprep.mubr.f32.mxu0 0.0
    %99 = vmatmul.mubr.f32.gmra.mrb[0].mxu0 %v29
    %v100 = vpop.f32.mrb[0].mxu0
    %v101 = vadd.f32 0.0, %v100
    %v102 = vpop.f32.mrb[0].mxu0
    %103 = vmatprep.mubr.f32.mxu0 0.0
    %104 = vmatmul.mubr.f32.gmra.mrb[0].mxu0 %v32
    %v105 = vpop.f32.mrb[0].mxu0
    %v106 = vadd.f32 0.0, %v105
    %v107 = vpop.f32.mrb[0].mxu0
    %108 = vdwg.mxu0
    %v109 = vld [vmem:[%s1] sm:$0x3]
    %v110 = vld [vmem:[%s3] sm:$0xff]
    %v111 = vld [vmem:[%s3 + $0x8] sm:$0xff]
    %v112 = vld [vmem:[%s3 + $0x10] sm:$0xff]
    %v113 = vld [vmem:[%s3 + $0x18] sm:$0xff]
    %v115 = vsel %vm27, %v109, 0
    %117 = vmatprep.subr.mxu0 0.0
    %118 = vmatpush1.msra.mxu0 %v110
    %119 = vmatprep.subr.mxu0 0.0
    %120 = vmatpush1.msra.mxu0 %v111
    %121 = vmatprep.subr.mxu0 0.0
    %122 = vmatpush1.msra.mxu0 %v112
    %123 = vmatprep.subr.mxu0 0.0
    %124 = vmatpush1.msra.mxu0 %v113
    %125 = vmatprep.subr.mxu0 0.0
    %126 = vmatpush1.msra.mxu0 0.0
    %127 = vmatprep.subr.mxu0 0.0
    %128 = vmatpush1.msra.mxu0 0.0
    %129 = vmatprep.subr.mxu0 0.0
    %130 = vmatpush1.msra.mxu0 0.0
    %131 = vmatprep.subr.mxu0 0.0
    %132 = vmatpush1.msra.mxu0 0.0
    %133 = vmatprep.subr.mxu0 0.0
    %134 = vmatpush1.msra.mxu0 0.0
    %135 = vmatprep.subr.mxu0 0.0
    %136 = vmatpush1.msra.mxu0 0.0
    %137 = vmatprep.subr.mxu0 0.0
    %138 = vmatpush1.msra.mxu0 0.0
    %139 = vmatprep.subr.mxu0 0.0
    %140 = vmatpush1.msra.mxu0 0.0
    %141 = vmatprep.subr.mxu0 0.0
    %142 = vmatpush1.msra.mxu0 0.0
    %143 = vmatprep.subr.mxu0 0.0
    %144 = vmatpush1.msra.mxu0 0.0
    %145 = vmatprep.subr.mxu0 0.0
    %146 = vmatpush1.msra.mxu0 0.0
    %147 = vmatprep.subr.mxu0 0.0
    %148 = vmatpush1.msra.mxu0 0.0
    %149 = vmatprep.subr.mxu0 0.0
    %150 = vmatpush1.msra.mxu0 0.0
    %151 = vmatprep.subr.mxu0 0.0
    %152 = vmatpush1.msra.mxu0 0.0
    %153 = vmatprep.subr.mxu0 0.0
    %154 = vmatpush1.msra.mxu0 0.0
    %155 = vmatprep.subr.mxu0 0.0
    %156 = vmatpush1.msra.mxu0 0.0
    %157 = vmatprep.subr.mxu0 0.0
    %158 = vmatpush1.msra.mxu0 0.0
    %159 = vmatprep.subr.mxu0 0.0
    %160 = vmatpush1.msra.mxu0 0.0
    %161 = vmatprep.subr.mxu0 0.0
    %162 = vmatpush1.msra.mxu0 0.0
    %163 = vmatprep.subr.mxu0 0.0
    %164 = vmatpush1.msra.mxu0 0.0
    %165 = vmatprep.subr.mxu0 0.0
    %166 = vmatpush1.msra.mxu0 0.0
    %167 = vmatprep.subr.mxu0 0.0
    %168 = vmatpush1.msra.mxu0 0.0
    %169 = vmatprep.subr.mxu0 0.0
    %170 = vmatpush1.msra.mxu0 0.0
    %171 = vmatprep.subr.mxu0 0.0
    %172 = vmatpush1.msra.mxu0 0.0
    %173 = vmatprep.subr.mxu0 0.0
    %174 = vmatpush1.msra.mxu0 0.0
    %175 = vmatprep.subr.mxu0 0.0
    %176 = vmatpush1.msra.mxu0 0.0
    %177 = vmatprep.subr.mxu0 0.0
    %178 = vmatpush1.msra.mxu0 0.0
    %179 = vmatprep.subr.mxu0 0.0
    %180 = vmatpush1.msra.mxu0 0.0
    %181 = vmatprep.mubr.f32.mxu0 0.0
    %182 = vmatmul.mubr.f32.gmra.mrb[0].mxu0 %v115
    %v183 = vpop.f32.mrb[0].mxu0
    %v184 = vadd.f32 0.0, %v183
    %v185 = vpop.f32.mrb[0].mxu0
    %186 = vdwg.mxu0
    %188 = vset.pattern.permute.xlu0 0
    %189 = vperm.xlu0 %188, %v184
    %v190 = vpop.permute.xlu0 %189
    %v191 = vlaneseq
    %v192 = vshrl.u32 %v191, 7
    %v193 = vsub.s32 0, %v192
    %v194 = vrot.slane %v190, %v193
    %v195 = vlaneseq
    %v196 = vshrl.u32 %v195, 7
    %v197 = vsub.s32 1, %v196
    %v198 = vrot.slane %v190, %v197
    %v201 = vadd.f32 %v101, %v194
    %v202 = vadd.f32 %v106, %v198
    %205 = vset.pattern.permute.xlu0 0
    %206 = vperm.xlu0 %205, %v201
    %v207 = vpop.permute.xlu0 %206
    %208 = vset.pattern.permute.xlu0 0
    %209 = vperm.xlu0 %208, %v202
    %v210 = vpop.permute.xlu0 %209
    %v211 = vlaneseq
    %v212 = vand.u32 %v211, 127
    %v213 = vlaneseq
    %v214 = vshrl.u32 %v213, 7
    %v215 = vsub.s32 %v212, %v214
    %v216 = vrot.slane %v207, %v215
    %v217 = vlaneseq
    %v218 = vshrl.u32 %v217, 7
    %v219 = vsub.s32 %v212, %v218
    %v220 = vrot.slane %v210, %v219
    %vm221 = vcmask 1041409
    %v222 = vsel %vm221, %v220, %v216
    %vm224 = vcmask 58368
    %v225 = vsel %vm224, %v222, -inf
    %226 = vmax.xlane.f32.xlu0 %v225
    %v227 = vpop.xlane.xlu0 %226
    %v229 = vlaneseq
    %v230 = vshrl.u32 %v229, 7
    %v231 = vsub.s32 0, %v230
    %v232 = vrot.slane %v227, %v231
    %v233 = vlaneseq
    %v234 = vshrl.u32 %v233, 7
    %v235 = vsub.s32 1, %v234
    %v236 = vrot.slane %v227, %v235
    %v239 = vsub.f32 %v201, %v232
    %v240 = vsub.f32 %v202, %v236
    %v241 = vmul.f32 %v239, 1.442695
    %v242 = vpow.pop %v241
    %v243 = vmul.f32 %v240, 1.442695
    %v244 = vpow.pop %v243
    %247 = vset.pattern.permute.xlu0 0
    %248 = vperm.xlu0 %247, %v242
    %v249 = vpop.permute.xlu0 %248
    %250 = vset.pattern.permute.xlu0 0
    %251 = vperm.xlu0 %250, %v244
    %v252 = vpop.permute.xlu0 %251
    %v253 = vlaneseq
    %v254 = vshrl.u32 %v253, 7
    %v255 = vsub.s32 %v212, %v254
    %v256 = vrot.slane %v249, %v255
    %v257 = vlaneseq
    %v258 = vshrl.u32 %v257, 7
    %v259 = vsub.s32 %v212, %v258
    %v260 = vrot.slane %v252, %v259
    %v261 = vsel %vm221, %v260, %v256
    %v263 = vsel %vm224, %v261, 0.0
    %264 = vadd.xlane.f32.xlu0 %v263
    %v265 = vpop.xlane.xlu0 %264
    %v267 = vlaneseq
    %v268 = vshrl.u32 %v267, 7
    %v269 = vsub.s32 0, %v268
    %v270 = vrot.slane %v265, %v269
    %v271 = vlaneseq
    %v272 = vshrl.u32 %v271, 7
    %v273 = vsub.s32 1, %v272
    %v274 = vrot.slane %v265, %v273
    %v277 = vrcp.pop %v270
    %v278 = vmul.f32 %v242, %v277
    %v279 = vrcp.pop %v274
    %v280 = vmul.f32 %v244, %v279
    %282 = vset.pattern.permute.xlu0 0
    %283 = vperm.xlu0 %282, %v278
    %v284 = vpop.permute.xlu0 %283
    %v285 = vlaneseq
    %v286 = vshrl.u32 %v285, 7
    %v287 = vsub.s32 %v212, %v286
    %v288 = vrot.slane %v284, %v287
    %vm289 = vcmask 64512
    %v290 = vsel %vm289, %v288, 0
    %292 = vmatprep.subr.mxu0 0.0
    %293 = vmatpush1.msra.mxu0 %v21
    %294 = vmatprep.subr.mxu0 0.0
    %295 = vmatpush1.msra.mxu0 0.0
    %296 = vmatprep.subr.mxu0 0.0
    %297 = vmatpush1.msra.mxu0 0.0
    %298 = vmatprep.subr.mxu0 0.0
    %299 = vmatpush1.msra.mxu0 0.0
    %300 = vmatprep.subr.mxu0 0.0
    %301 = vmatpush1.msra.mxu0 0.0
    %302 = vmatprep.subr.mxu0 0.0
    %303 = vmatpush1.msra.mxu0 0.0
    %304 = vmatprep.subr.mxu0 0.0
    %305 = vmatpush1.msra.mxu0 0.0
    %306 = vmatprep.subr.mxu0 0.0
    %307 = vmatpush1.msra.mxu0 0.0
    %308 = vmatprep.subr.mxu0 0.0
    %309 = vmatpush1.msra.mxu0 0.0
    %310 = vmatprep.subr.mxu0 0.0
    %311 = vmatpush1.msra.mxu0 0.0
    %312 = vmatprep.subr.mxu0 0.0
    %313 = vmatpush1.msra.mxu0 0.0
    %314 = vmatprep.subr.mxu0 0.0
    %315 = vmatpush1.msra.mxu0 0.0
    %316 = vmatprep.subr.mxu0 0.0
    %317 = vmatpush1.msra.mxu0 0.0
    %318 = vmatprep.subr.mxu0 0.0
    %319 = vmatpush1.msra.mxu0 0.0
    %320 = vmatprep.subr.mxu0 0.0
    %321 = vmatpush1.msra.mxu0 0.0
    %322 = vmatprep.subr.mxu0 0.0
    %323 = vmatpush1.msra.mxu0 0.0
    %324 = vmatprep.subr.mxu0 0.0
    %325 = vmatpush1.msra.mxu0 0.0
    %326 = vmatprep.subr.mxu0 0.0
    %327 = vmatpush1.msra.mxu0 0.0
    %328 = vmatprep.subr.mxu0 0.0
    %329 = vmatpush1.msra.mxu0 0.0
    %330 = vmatprep.subr.mxu0 0.0
    %331 = vmatpush1.msra.mxu0 0.0
    %332 = vmatprep.subr.mxu0 0.0
    %333 = vmatpush1.msra.mxu0 0.0
    %334 = vmatprep.subr.mxu0 0.0
    %335 = vmatpush1.msra.mxu0 0.0
    %336 = vmatprep.subr.mxu0 0.0
    %337 = vmatpush1.msra.mxu0 0.0
    %338 = vmatprep.subr.mxu0 0.0
    %339 = vmatpush1.msra.mxu0 0.0
    %340 = vmatprep.subr.mxu0 0.0
    %341 = vmatpush1.msra.mxu0 0.0
    %342 = vmatprep.subr.mxu0 0.0
    %343 = vmatpush1.msra.mxu0 0.0
    %344 = vmatprep.subr.mxu0 0.0
    %345 = vmatpush1.msra.mxu0 0.0
    %346 = vmatprep.subr.mxu0 0.0
    %347 = vmatpush1.msra.mxu0 0.0
    %348 = vmatprep.subr.mxu0 0.0
    %349 = vmatpush1.msra.mxu0 0.0
    %350 = vmatprep.subr.mxu0 0.0
    %351 = vmatpush1.msra.mxu0 0.0
    %352 = vmatprep.subr.mxu0 0.0
    %353 = vmatpush1.msra.mxu0 0.0
    %354 = vmatprep.subr.mxu0 0.0
    %355 = vmatpush1.msra.mxu0 0.0
    %356 = vmatprep.mubr.f32.mxu0 0.0
    %357 = vmatmul.mubr.f32.gmra.mrb[0].mxu0 %v290
    %v358 = vpop.f32.mrb[0].mxu0
    %v359 = vadd.f32 0.0, %v358
    %v360 = vpop.f32.mrb[0].mxu0
    %361 = vdwg.mxu0
    %363 = vset.pattern.permute.xlu0 0
    %364 = vperm.xlu0 %363, %v280
    %v365 = vpop.permute.xlu0 %364
    %v366 = vlaneseq
    %v367 = vshrl.u32 %v366, 7
    %v368 = vsub.s32 %v212, %v367
    %v369 = vrot.slane %v365, %v368
    %v370 = vsel %vm289, %v369, 0
    %372 = vmatprep.subr.mxu0 0.0
    %373 = vmatpush1.msra.mxu0 %v22
    %374 = vmatprep.subr.mxu0 0.0
    %375 = vmatpush1.msra.mxu0 0.0
    %376 = vmatprep.subr.mxu0 0.0
    %377 = vmatpush1.msra.mxu0 0.0
    %378 = vmatprep.subr.mxu0 0.0
    %379 = vmatpush1.msra.mxu0 0.0
    %380 = vmatprep.subr.mxu0 0.0
    %381 = vmatpush1.msra.mxu0 0.0
    %382 = vmatprep.subr.mxu0 0.0
    %383 = vmatpush1.msra.mxu0 0.0
    %384 = vmatprep.subr.mxu0 0.0
    %385 = vmatpush1.msra.mxu0 0.0
    %386 = vmatprep.subr.mxu0 0.0
    %387 = vmatpush1.msra.mxu0 0.0
    %388 = vmatprep.subr.mxu0 0.0
    %389 = vmatpush1.msra.mxu0 0.0
    %390 = vmatprep.subr.mxu0 0.0
    %391 = vmatpush1.msra.mxu0 0.0
    %392 = vmatprep.subr.mxu0 0.0
    %393 = vmatpush1.msra.mxu0 0.0
    %394 = vmatprep.subr.mxu0 0.0
    %395 = vmatpush1.msra.mxu0 0.0
    %396 = vmatprep.subr.mxu0 0.0
    %397 = vmatpush1.msra.mxu0 0.0
    %398 = vmatprep.subr.mxu0 0.0
    %399 = vmatpush1.msra.mxu0 0.0
    %400 = vmatprep.subr.mxu0 0.0
    %401 = vmatpush1.msra.mxu0 0.0
    %402 = vmatprep.subr.mxu0 0.0
    %403 = vmatpush1.msra.mxu0 0.0
    %404 = vmatprep.subr.mxu0 0.0
    %405 = vmatpush1.msra.mxu0 0.0
    %406 = vmatprep.subr.mxu0 0.0
    %407 = vmatpush1.msra.mxu0 0.0
    %408 = vmatprep.subr.mxu0 0.0
    %409 = vmatpush1.msra.mxu0 0.0
    %410 = vmatprep.subr.mxu0 0.0
    %411 = vmatpush1.msra.mxu0 0.0
    %412 = vmatprep.subr.mxu0 0.0
    %413 = vmatpush1.msra.mxu0 0.0
    %414 = vmatprep.subr.mxu0 0.0
    %415 = vmatpush1.msra.mxu0 0.0
    %416 = vmatprep.subr.mxu0 0.0
    %417 = vmatpush1.msra.mxu0 0.0
    %418 = vmatprep.subr.mxu0 0.0
    %419 = vmatpush1.msra.mxu0 0.0
    %420 = vmatprep.subr.mxu0 0.0
    %421 = vmatpush1.msra.mxu0 0.0
    %422 = vmatprep.subr.mxu0 0.0
    %423 = vmatpush1.msra.mxu0 0.0
    %424 = vmatprep.subr.mxu0 0.0
    %425 = vmatpush1.msra.mxu0 0.0
    %426 = vmatprep.subr.mxu0 0.0
    %427 = vmatpush1.msra.mxu0 0.0
    %428 = vmatprep.subr.mxu0 0.0
    %429 = vmatpush1.msra.mxu0 0.0
    %430 = vmatprep.subr.mxu0 0.0
    %431 = vmatpush1.msra.mxu0 0.0
    %432 = vmatprep.subr.mxu0 0.0
    %433 = vmatpush1.msra.mxu0 0.0
    %434 = vmatprep.subr.mxu0 0.0
    %435 = vmatpush1.msra.mxu0 0.0
    %436 = vmatprep.mubr.f32.mxu0 0.0
    %437 = vmatmul.mubr.f32.gmra.mrb[0].mxu0 %v370
    %v438 = vpop.f32.mrb[0].mxu0
    %v439 = vadd.f32 0.0, %v438
    %v440 = vpop.f32.mrb[0].mxu0
    %441 = vdwg.mxu0
    %v442 = vld [vmem:[%s4] sm:$0xff]
    %v443 = vld [vmem:[%s4 + $0x8] sm:$0xff]
    %v444 = vld [vmem:[%s4 + $0x10] sm:$0xff]
    %v445 = vld [vmem:[%s4 + $0x18] sm:$0xff]
    %v448 = vrot.slane %v439, 7
    %v449 = vsel %vm221, %v448, %v359
    %v450 = vsel %vm27, %v449, 0
    %452 = vmatprep.subr.mxu0 0.0
    %453 = vmatpush1.msra.mxu0 %v442
    %454 = vmatprep.subr.mxu0 0.0
    %455 = vmatpush1.msra.mxu0 %v443
    %456 = vmatprep.subr.mxu0 0.0
    %457 = vmatpush1.msra.mxu0 %v444
    %458 = vmatprep.subr.mxu0 0.0
    %459 = vmatpush1.msra.mxu0 %v445
    %460 = vmatprep.subr.mxu0 0.0
    %461 = vmatpush1.msra.mxu0 0.0
    %462 = vmatprep.subr.mxu0 0.0
    %463 = vmatpush1.msra.mxu0 0.0
    %464 = vmatprep.subr.mxu0 0.0
    %465 = vmatpush1.msra.mxu0 0.0
    %466 = vmatprep.subr.mxu0 0.0
    %467 = vmatpush1.msra.mxu0 0.0
    %468 = vmatprep.subr.mxu0 0.0
    %469 = vmatpush1.msra.mxu0 0.0
    %470 = vmatprep.subr.mxu0 0.0
    %471 = vmatpush1.msra.mxu0 0.0
    %472 = vmatprep.subr.mxu0 0.0
    %473 = vmatpush1.msra.mxu0 0.0
    %474 = vmatprep.subr.mxu0 0.0
    %475 = vmatpush1.msra.mxu0 0.0
    %476 = vmatprep.subr.mxu0 0.0
    %477 = vmatpush1.msra.mxu0 0.0
    %478 = vmatprep.subr.mxu0 0.0
    %479 = vmatpush1.msra.mxu0 0.0
    %480 = vmatprep.subr.mxu0 0.0
    %481 = vmatpush1.msra.mxu0 0.0
    %482 = vmatprep.subr.mxu0 0.0
    %483 = vmatpush1.msra.mxu0 0.0
    %484 = vmatprep.subr.mxu0 0.0
    %485 = vmatpush1.msra.mxu0 0.0
    %486 = vmatprep.subr.mxu0 0.0
    %487 = vmatpush1.msra.mxu0 0.0
    %488 = vmatprep.subr.mxu0 0.0
    %489 = vmatpush1.msra.mxu0 0.0
    %490 = vmatprep.subr.mxu0 0.0
    %491 = vmatpush1.msra.mxu0 0.0
    %492 = vmatprep.subr.mxu0 0.0
    %493 = vmatpush1.msra.mxu0 0.0
    %494 = vmatprep.subr.mxu0 0.0
    %495 = vmatpush1.msra.mxu0 0.0
    %496 = vmatprep.subr.mxu0 0.0
    %497 = vmatpush1.msra.mxu0 0.0
    %498 = vmatprep.subr.mxu0 0.0
    %499 = vmatpush1.msra.mxu0 0.0
    %500 = vmatprep.subr.mxu0 0.0
    %501 = vmatpush1.msra.mxu0 0.0
    %502 = vmatprep.subr.mxu0 0.0
    %503 = vmatpush1.msra.mxu0 0.0
    %504 = vmatprep.subr.mxu0 0.0
    %505 = vmatpush1.msra.mxu0 0.0
    %506 = vmatprep.subr.mxu0 0.0
    %507 = vmatpush1.msra.mxu0 0.0
    %508 = vmatprep.subr.mxu0 0.0
    %509 = vmatpush1.msra.mxu0 0.0
    %510 = vmatprep.subr.mxu0 0.0
    %511 = vmatpush1.msra.mxu0 0.0
    %512 = vmatprep.subr.mxu0 0.0
    %513 = vmatpush1.msra.mxu0 0.0
    %514 = vmatprep.subr.mxu0 0.0
    %515 = vmatpush1.msra.mxu0 0.0
    %516 = vmatprep.mubr.f32.mxu0 0.0
    %517 = vmatmul.mubr.f32.gmra.mrb[0].mxu0 %v450
    %v518 = vpop.f32.mrb[0].mxu0
    %v519 = vadd.f32 0.0, %v518
    %v520 = vpop.f32.mrb[0].mxu0
    %521 = vdwg.mxu0
    %523 = vset.pattern.permute.xlu0 0
    %524 = vperm.xlu0 %523, %v519
    %v525 = vpop.permute.xlu0 %524
    %v526 = vlaneseq
    %v527 = vshrl.u32 %v526, 7
    %v528 = vsub.s32 0, %v527
    %v529 = vrot.slane %v525, %v528
    %v530 = vlaneseq
    %v531 = vshrl.u32 %v530, 7
    %v532 = vsub.s32 1, %v531
    %v533 = vrot.slane %v525, %v532
    %v536 = vadd.f32 %v101, %v529
    %v537 = vadd.f32 %v106, %v533
    %540 = vset.pattern.permute.xlu0 1
    %541 = vperm.xlu0 %540, %v536
    %v542 = vpop.permute.xlu0 %541
    %543 = vset.pattern.permute.xlu0 1
    %544 = vperm.xlu0 %543, %v537
    %v545 = vpop.permute.xlu0 %544
    %v546 = vlaneseq
    %v547 = vshrl.u32 %v546, 7
    %v548 = vsub.s32 %v212, %v547
    %v549 = vrot.slane %v542, %v548
    %v550 = vlaneseq
    %v551 = vshrl.u32 %v550, 7
    %v552 = vsub.s32 %v212, %v551
    %v553 = vrot.slane %v545, %v552
    %v554 = vsel %vm221, %v553, %v549
    %556 = vst.msk [vmem:[#allocation2] sm:$0x3] %vm224, %v554
    // Predicated region
    $region22: #{attention_forward.1} parent=1 // pred_check
      _
    $region23: #{attention_forward.1} parent=1 // pred_check_branch
      %558 = sbr.rel (0) target = $region25
    $region24: #{attention_forward.1} parent=1 // pred_region
      %s560 = ssub.s32 32, 32
      %561 = vsyncadd [#allocation3], %s560
      %s563 = sshll.u32 [#allocation2], 4
      %s564 = int_to_ptr.vmem [resolvable:$true] %s563
      %566 = dma.vmem_to_hbm [thread:$0]  %s564, 32, %s5, [#allocation3]
    $region25: #{attention_forward.1} parent=1 // pred_fallthru
      _
    // Predicated region
    $region26: #{attention_forward.1} parent=1 // pred_check
      _
    $region27: #{attention_forward.1} parent=1 // pred_check_branch
      %568 = sbr.rel (0) target = $region29
    $region28: #{attention_forward.1} parent=1 // pred_region
      %569 = dma.done [#allocation3], 32
    $region29: #{attention_forward.1} parent=1 // pred_fallthru
      _
    %570 = vsyncpa [#allocation3], 1

</llo_original>
